<compile_context>
chip_gen: v6e
topology: v6e:2x2x1
jax: 0.10.0
libtpu: 0.0.40
codegen_flags: <defaults>
</compile_context>

<pallas_src>
import functools

import jax
import jax.numpy as jnp
import numpy as np
from jax.experimental import pallas as pl
from jax.experimental.pallas import tpu as pltpu


# ----------------------------------------------------------------------------
# helpers
# ----------------------------------------------------------------------------
def _round_up(n, m):
    return ((n + m - 1) // m) * m


def _pad2(x, rows, cols):
    r, c = x.shape
    return jnp.pad(x, ((0, rows - r), (0, cols - c)))


# ----------------------------------------------------------------------------
# Pallas kernel: whole forward pass fused (small shapes -> everything in VMEM).
# ----------------------------------------------------------------------------
def gcn_kernel(xa_ref,    # [Np, Fa]   node features augmented with a ones column
               a_ref,     # [Np, Np]   normalized adjacency A_hat
               wf_ref,    # [Fa, Hp]   fused [[W1^T Theta1^T]; [b1 Theta1^T]]
               bc1_ref,   # [1,  Hp]   conv1 bias
               drop_ref,  # [Np, Hp]   dropout scale mask in {0, 2}
               pa_ref,    # [Bp, Np]   pool @ A_hat
               wc2t_ref,  # [Hp, H2p]  conv2 Theta^T
               bc2_ref,   # [1,  H2p]  conv2 bias
               w2t_ref,   # [H2p, Cp]  lin2 W^T
               b2_ref,    # [1,  Cp]   lin2 bias
               out_ref):  # [Bp, Cp]
    f32 = jnp.float32

    # conv1 with lin1 folded in (exact):
    #   A @ ((x W1^T + b1) Theta1^T) + bc1  ==  (A @ [x|1]) @ [[W1^T Theta1^T];[b1 Theta1^T]] + bc1
    # Aggregation first so the only O(N^2) matmul contracts over the narrow F+1 axis.
    ax = jnp.dot(a_ref[...], xa_ref[...], preferred_element_type=f32)          # [Np, Fa]
    h = jnp.dot(ax, wf_ref[...], preferred_element_type=f32) + bc1_ref[...]    # [Np, Hp]

    # dropout(p=0.5) + relu fused: relu(dropout(h)) == max(h * {0,2}, 0)
    h = jnp.maximum(h * drop_ref[...], 0.0)

    # conv2 aggregation fused with global_mean_pool:
    #   pool @ (A @ (h Theta2^T) + bc2) == (PA @ h) @ Theta2^T + bc2   (pool rows sum to 1)
    g = jnp.dot(pa_ref[...], h, preferred_element_type=f32)                    # [Bp, Hp]
    g = jnp.dot(g, wc2t_ref[...], preferred_element_type=f32) + bc2_ref[...]   # [Bp, H2p]

    # lin2
    out_ref[...] = jnp.dot(g, w2t_ref[...], preferred_element_type=f32) + b2_ref[...]


# ----------------------------------------------------------------------------
# Glue
# ----------------------------------------------------------------------------
def build_graph_mats(edge_index, batch, num_nodes, num_graphs):
    """Dense normalized adjacency A_hat, pool matrix, and fused PA = pool @ A_hat.
    Static per graph batch -> can be cached across forward calls."""
    N = num_nodes
    f32 = jnp.float32
    src, dst = edge_index[0], edge_index[1]
    a = jnp.zeros((N, N), f32).at[dst, src].add(1.0)
    a = a + jnp.eye(N, dtype=f32)                      # self-loops
    deg = jnp.sum(a, axis=1)
    dinv = jnp.where(deg > 0, jax.lax.rsqrt(deg), 0.0)
    a_hat = a * dinv[:, None] * dinv[None, :]

    onehot = (batch[None, :] == jnp.arange(num_graphs)[:, None]).astype(f32)
    counts = jnp.maximum(jnp.sum(onehot, axis=1, keepdims=True), 1.0)
    pool = onehot / counts
    pa = pool @ a_hat
    return a_hat, pool, pa


def fuse_params(params):
    """Exact algebraic fusion of lin1 into conv1's projection."""
    wf = jnp.concatenate(
        [params["w1t"] @ params["wc1t"],      # W1^T Theta1^T   [F, H]
         params["b1"] @ params["wc1t"]],      # b1  Theta1^T    [1, H]
        axis=0)                               # -> [F+1, H]
    return wf


@functools.partial(jax.jit, static_argnames=("num_graphs",))
def gcn_forward(x, edge_index, batch, params, num_graphs, dropout_key):
    N, F = x.shape
    H = params["wc1t"].shape[1]
    H2 = params["wc2t"].shape[1]
    C = params["w2t"].shape[1]
    f32 = jnp.float32

    a_hat, _, pa = build_graph_mats(edge_index, batch, N, num_graphs)
    wf = fuse_params(params)

    # dropout mask drawn in the glue (no in-kernel PRNG): keep w.p. 0.5, scale 2
    keep = jax.random.bernoulli(dropout_key, 0.5, (N, H))
    drop = keep.astype(f32) * 2.0

    # lane-dense zero padding (exact): last dims -> multiples of 128,
    # pooled-output rows -> multiple of 8.
    LP = 128
    Np = _round_up(N, LP)
    Fap = _round_up(F + 1, LP)
    Hp = _round_up(H, LP)
    H2p = _round_up(H2, LP)
    Cp = _round_up(C, LP)
    Bp = _round_up(num_graphs, 8)

    x_aug = jnp.concatenate([x.astype(f32), jnp.ones((N, 1), f32)], axis=1)

    args = (
        _pad2(x_aug, Np, Fap),
        _pad2(a_hat, Np, Np),
        _pad2(wf, Fap, Hp),
        _pad2(params["bc1"], 1, Hp),
        _pad2(drop, Np, Hp),
        _pad2(pa, Bp, Np),
        _pad2(params["wc2t"], Hp, H2p),
        _pad2(params["bc2"], 1, H2p),
        _pad2(params["w2t"], H2p, Cp),
        _pad2(params["b2"], 1, Cp),
    )

    vmem = pl.BlockSpec(memory_space=pltpu.MemorySpace.VMEM)
    out = pl.pallas_call(
        gcn_kernel,
        out_shape=jax.ShapeDtypeStruct((Bp, Cp), f32),
        in_specs=[vmem] * len(args),
        out_specs=vmem,
    )(*args)
    return out[:num_graphs, :C]


def reference_forward(x, edge_index, batch, params, num_graphs, dropout_key):
    """Unfused pure-JAX reference (same dropout mask) for validation."""
    a_hat, pool, _ = build_graph_mats(edge_index, batch, x.shape[0], num_graphs)
    h = x @ params["w1t"] + params["b1"]
    h = a_hat @ (h @ params["wc1t"]) + params["bc1"]
    keep = jax.random.bernoulli(dropout_key, 0.5, h.shape)
    h = jnp.where(keep, h * 2.0, 0.0)
    h = jnp.maximum(h, 0.0)
    h = a_hat @ (h @ params["wc2t"]) + params["bc2"]
    g = pool @ h
    return g @ params["w2t"] + params["b2"]


def init_params(key, num_node_features, hidden_channels, num_classes):
    F, H = num_node_features, hidden_channels
    H2 = hidden_channels // 2
    ks = jax.random.split(key, 8)
    s = 0.1
    return {
        # lin1: Linear(F, F)
        "w1t":  (jax.random.normal(ks[0], (F, F)) * s).astype(jnp.float32),
        "b1":   (jax.random.normal(ks[1], (1, F)) * s).astype(jnp.float32),
        # conv1: GCNConv(F, H)
        "wc1t": (jax.random.normal(ks[2], (F, H)) * s).astype(jnp.float32),
        "bc1":  (jax.random.normal(ks[3], (1, H)) * s).astype(jnp.float32),
        # conv2: GCNConv(H, H//2)
        "wc2t": (jax.random.normal(ks[4], (H, H2)) * s).astype(jnp.float32),
        "bc2":  (jax.random.normal(ks[5], (1, H2)) * s).astype(jnp.float32),
        # lin2: Linear(H//2, num_classes)
        "w2t":  (jax.random.normal(ks[6], (H2, num_classes)) * s).astype(jnp.float32),
        "b2":   (jax.random.normal(ks[7], (1, num_classes)) * s).astype(jnp.float32),
    }


if __name__ == "__main__":
    num_node_features = 8
    hidden_channels = 32
    num_classes = 3
    N = 16          # total nodes
    E = 40          # directed edges
    B = 2           # graphs in the batch

    key = jax.random.PRNGKey(0)
    kx, ke, kp, kd = jax.random.split(key, 4)

    x = jax.random.normal(kx, (N, num_node_features), dtype=jnp.float32)
    edge_index = jax.random.randint(ke, (2, E), 0, N, dtype=jnp.int32)
    batch = jnp.concatenate([jnp.zeros(N // 2, jnp.int32),
                             jnp.ones(N - N // 2, jnp.int32)])

    params = init_params(kp, num_node_features, hidden_channels, num_classes)

    out = gcn_forward(x, edge_index, batch, params, num_graphs=B, dropout_key=kd)
    out = jax.block_until_ready(out)
    assert out.shape == (B, num_classes)

    ref = reference_forward(x, edge_index, batch, params, B, kd)
    np.testing.assert_allclose(np.asarray(out), np.asarray(ref), rtol=1e-3, atol=1e-5)

    print("KERNEL_OK")
</pallas_src>

<mosaic_0001>
module attributes {stable_mosaic.version = 11 : i64} {
  func.func private @main(%arg0: i32) attributes {dimension_semantics = [#tpu.dimension_semantics<core_parallel>], iteration_bounds = array<i64: 2>, tpu.core_type = #tpu.core_type<sc_scalar_subcore>, window_params = []} {
    return
  }
}

module attributes {stable_mosaic.version = 11 : i64} {
  func.func private @main(%arg0: i32) attributes {dimension_semantics = [#tpu.dimension_semantics<core_parallel>], iteration_bounds = array<i64: 2>, tpu.core_type = #tpu.core_type<sc_scalar_subcore>, window_params = []} {
    return
  }
}

module attributes {stable_mosaic.version = 11 : i64} {
  func.func @gcn_kernel(%arg0: memref<128x128xf32, #tpu.memory_space<vmem>>, %arg1: memref<128x128xf32, #tpu.memory_space<vmem>>, %arg2: memref<128x128xf32, #tpu.memory_space<vmem>>, %arg3: memref<1x128xf32, #tpu.memory_space<vmem>>, %arg4: memref<128x128xf32, #tpu.memory_space<vmem>>, %arg5: memref<8x128xf32, #tpu.memory_space<vmem>>, %arg6: memref<128x128xf32, #tpu.memory_space<vmem>>, %arg7: memref<1x128xf32, #tpu.memory_space<vmem>>, %arg8: memref<128x128xf32, #tpu.memory_space<vmem>>, %arg9: memref<1x128xf32, #tpu.memory_space<vmem>>, %arg10: memref<8x128xf32, #tpu.memory_space<vmem>>) attributes {dimension_semantics = [], scalar_prefetch = 0 : i64, scratch_operands = 0 : i64, tpu.core_type = #tpu.core_type<tc>} {
    %c0 = arith.constant 0 : index
    %c0_0 = arith.constant 0 : index
    %0 = vector.load %arg1[%c0, %c0_0] : memref<128x128xf32, #tpu.memory_space<vmem>>, vector<128x128xf32>
    %c0_1 = arith.constant 0 : index
    %c0_2 = arith.constant 0 : index
    %1 = vector.load %arg0[%c0_1, %c0_2] : memref<128x128xf32, #tpu.memory_space<vmem>>, vector<128x128xf32>
    %cst = arith.constant dense<0.000000e+00> : vector<128x128xf32>
    %2 = tpu.matmul %0, %1, %cst {dimension_numbers = #tpu.dot_dimension_numbers<[1], [0], [0], [1], [0, 0, 1, 1], [], []>} : vector<128x128xf32>, vector<128x128xf32>, vector<128x128xf32> -> vector<128x128xf32>
    %c0_3 = arith.constant 0 : index
    %c0_4 = arith.constant 0 : index
    %3 = vector.load %arg2[%c0_3, %c0_4] : memref<128x128xf32, #tpu.memory_space<vmem>>, vector<128x128xf32>
    %cst_5 = arith.constant dense<0.000000e+00> : vector<128x128xf32>
    %4 = tpu.matmul %2, %3, %cst_5 {dimension_numbers = #tpu.dot_dimension_numbers<[1], [0], [0], [1], [0, 0, 1, 1], [], []>} : vector<128x128xf32>, vector<128x128xf32>, vector<128x128xf32> -> vector<128x128xf32>
    %c0_6 = arith.constant 0 : index
    %c0_7 = arith.constant 0 : index
    %5 = vector.load %arg3[%c0_6, %c0_7] : memref<1x128xf32, #tpu.memory_space<vmem>>, vector<1x128xf32>
    %6 = vector.broadcast %5 : vector<1x128xf32> to vector<128x128xf32>
    %7 = arith.addf %4, %6 : vector<128x128xf32>
    %c0_8 = arith.constant 0 : index
    %c0_9 = arith.constant 0 : index
    %8 = vector.load %arg4[%c0_8, %c0_9] : memref<128x128xf32, #tpu.memory_space<vmem>>, vector<128x128xf32>
    %9 = arith.mulf %7, %8 : vector<128x128xf32>
    %cst_10 = arith.constant 0.000000e+00 : f32
    %10 = vector.broadcast %cst_10 : f32 to vector<128x128xf32>
    %11 = arith.maximumf %9, %10 : vector<128x128xf32>
    %c0_11 = arith.constant 0 : index
    %c0_12 = arith.constant 0 : index
    %12 = vector.load %arg5[%c0_11, %c0_12] : memref<8x128xf32, #tpu.memory_space<vmem>>, vector<8x128xf32>
    %cst_13 = arith.constant dense<0.000000e+00> : vector<8x128xf32>
    %13 = tpu.matmul %12, %11, %cst_13 {dimension_numbers = #tpu.dot_dimension_numbers<[1], [0], [0], [1], [0, 0, 1, 1], [], []>} : vector<8x128xf32>, vector<128x128xf32>, vector<8x128xf32> -> vector<8x128xf32>
    %c0_14 = arith.constant 0 : index
    %c0_15 = arith.constant 0 : index
    %14 = vector.load %arg6[%c0_14, %c0_15] : memref<128x128xf32, #tpu.memory_space<vmem>>, vector<128x128xf32>
    %cst_16 = arith.constant dense<0.000000e+00> : vector<8x128xf32>
    %15 = tpu.matmul %13, %14, %cst_16 {dimension_numbers = #tpu.dot_dimension_numbers<[1], [0], [0], [1], [0, 0, 1, 1], [], []>} : vector<8x128xf32>, vector<128x128xf32>, vector<8x128xf32> -> vector<8x128xf32>
    %c0_17 = arith.constant 0 : index
    %c0_18 = arith.constant 0 : index
    %16 = vector.load %arg7[%c0_17, %c0_18] : memref<1x128xf32, #tpu.memory_space<vmem>>, vector<1x128xf32>
    %17 = vector.broadcast %16 : vector<1x128xf32> to vector<8x128xf32>
    %18 = arith.addf %15, %17 : vector<8x128xf32>
    %c0_19 = arith.constant 0 : index
    %c0_20 = arith.constant 0 : index
    %19 = vector.load %arg8[%c0_19, %c0_20] : memref<128x128xf32, #tpu.memory_space<vmem>>, vector<128x128xf32>
    %cst_21 = arith.constant dense<0.000000e+00> : vector<8x128xf32>
    %20 = tpu.matmul %18, %19, %cst_21 {dimension_numbers = #tpu.dot_dimension_numbers<[1], [0], [0], [1], [0, 0, 1, 1], [], []>} : vector<8x128xf32>, vector<128x128xf32>, vector<8x128xf32> -> vector<8x128xf32>
    %c0_22 = arith.constant 0 : index
    %c0_23 = arith.constant 0 : index
    %21 = vector.load %arg9[%c0_22, %c0_23] : memref<1x128xf32, #tpu.memory_space<vmem>>, vector<1x128xf32>
    %22 = vector.broadcast %21 : vector<1x128xf32> to vector<8x128xf32>
    %23 = arith.addf %20, %22 : vector<8x128xf32>
    %c0_24 = arith.constant 0 : index
    %c0_25 = arith.constant 0 : index
    %24 = vector.load %arg10[%c0_24, %c0_25] : memref<8x128xf32, #tpu.memory_space<vmem>>, vector<8x128xf32>
    tpu.vector_store %arg10[%c0_24, %c0_25], %23 {strides = array<i32>} : memref<8x128xf32, #tpu.memory_space<vmem>>, vector<8x128xf32>,
    return
  }
}

</mosaic_0001>

<llo_original>
// kernel: gcn_forward.1
$region0: #{gcn_forward.1}
  #allocation0 [shape = 'u32[]', space=smem, size = 0x4, offset = 0x4, fixed_abs, tag = 'smem constant byte address 0x4 - core index']
  #allocation1 [shape = 'u32[144,128]{1,0:T(1,128)}', space=vmem, size = 0x12000, scoped, tag = 'internal scratch']
  %s0 = inlined_call_operand.vmem [shape: f32[128,128], index: 0, kind: input, shape index: {}]
  %s1 = inlined_call_operand.vmem [shape: f32[128,128], index: 1, kind: input, shape index: {}]
  %s2 = inlined_call_operand.vmem [shape: f32[128,128], index: 2, kind: input, shape index: {}]
  %s3 = inlined_call_operand.vmem [shape: f32[1,128], index: 3, kind: input, shape index: {}]
  %s4 = inlined_call_operand.vmem [shape: f32[128,128], index: 4, kind: input, shape index: {}]
  %s5 = inlined_call_operand.vmem [shape: f32[8,128], index: 5, kind: input, shape index: {}]
  %s6 = inlined_call_operand.vmem [shape: f32[128,128], index: 6, kind: input, shape index: {}]
  %s7 = inlined_call_operand.vmem [shape: f32[1,128], index: 7, kind: input, shape index: {}]
  %s8 = inlined_call_operand.vmem [shape: f32[128,128], index: 8, kind: input, shape index: {}]
  %s9 = inlined_call_operand.vmem [shape: f32[1,128], index: 9, kind: input, shape index: {}]
  %s10 = inlined_call_operand.vmem [shape: f32[8,128], index: 10, kind: output, shape index: {}]
  %s11 = sld [smem:[#allocation0]]
  $region50: #{gcn_forward.1} parent=0
    _
  %s13 = ssub.s32 1, %s11
  %s14 = scalar_select 0, %s13, %s11
  // Predicated region
  $region2: #{gcn_forward.1} parent=0 // pred_check
    _
  $region3: #{gcn_forward.1} parent=0 // pred_check_branch
    %16 = sbr.rel (0) target = $region5
  $region4: #{gcn_forward.1} parent=0 // pred_region
    _
  $region5: #{gcn_forward.1} parent=0 // pred_fallthru
    _
  // Predicated region
  $region6: #{gcn_forward.1} parent=0 // pred_check
    _
  $region7: #{gcn_forward.1} parent=0 // pred_check_branch
    %18 = sbr.rel (0) target = $region9
  $region8: #{gcn_forward.1} parent=0 // pred_region
    _
  $region9: #{gcn_forward.1} parent=0 // pred_fallthru
    _
  // Predicated region
  $region10: #{gcn_forward.1} parent=0 // pred_check
    _
  $region11: #{gcn_forward.1} parent=0 // pred_check_branch
    %20 = sbr.rel (0) target = $region13
  $region12: #{gcn_forward.1} parent=0 // pred_region
    _
  $region13: #{gcn_forward.1} parent=0 // pred_fallthru
    _
  // Predicated region
  $region14: #{gcn_forward.1} parent=0 // pred_check
    _
  $region15: #{gcn_forward.1} parent=0 // pred_check_branch
    %22 = sbr.rel (0) target = $region17
  $region16: #{gcn_forward.1} parent=0 // pred_region
    _
  $region17: #{gcn_forward.1} parent=0 // pred_fallthru
    _
  // Predicated region
  $region18: #{gcn_forward.1} parent=0 // pred_check
    _
  $region19: #{gcn_forward.1} parent=0 // pred_check_branch
    %24 = sbr.rel (0) target = $region21
  $region20: #{gcn_forward.1} parent=0 // pred_region
    _
  $region21: #{gcn_forward.1} parent=0 // pred_fallthru
    _
  // Predicated region
  $region22: #{gcn_forward.1} parent=0 // pred_check
    _
  $region23: #{gcn_forward.1} parent=0 // pred_check_branch
    %26 = sbr.rel (0) target = $region25
  $region24: #{gcn_forward.1} parent=0 // pred_region
    _
  $region25: #{gcn_forward.1} parent=0 // pred_fallthru
    _
  // Predicated region
  $region26: #{gcn_forward.1} parent=0 // pred_check
    _
  $region27: #{gcn_forward.1} parent=0 // pred_check_branch
    %28 = sbr.rel (0) target = $region29
  $region28: #{gcn_forward.1} parent=0 // pred_region
    _
  $region29: #{gcn_forward.1} parent=0 // pred_fallthru
    _
  // Predicated region
  $region30: #{gcn_forward.1} parent=0 // pred_check
    _
  $region31: #{gcn_forward.1} parent=0 // pred_check_branch
    %30 = sbr.rel (0) target = $region33
  $region32: #{gcn_forward.1} parent=0 // pred_region
    _
  $region33: #{gcn_forward.1} parent=0 // pred_fallthru
    _
  // Predicated region
  $region34: #{gcn_forward.1} parent=0 // pred_check
    _
  $region35: #{gcn_forward.1} parent=0 // pred_check_branch
    %32 = sbr.rel (0) target = $region37
  $region36: #{gcn_forward.1} parent=0 // pred_region
    _
  $region37: #{gcn_forward.1} parent=0 // pred_fallthru
    _
  // Predicated region
  $region38: #{gcn_forward.1} parent=0 // pred_check
    _
  $region39: #{gcn_forward.1} parent=0 // pred_check_branch
    %34 = sbr.rel (0) target = $region41
  $region40: #{gcn_forward.1} parent=0 // pred_region
    _
  $region41: #{gcn_forward.1} parent=0 // pred_fallthru
    _
  %v35 = vld [vmem:[%s1] sm:$0xff]
  %v36 = vld [vmem:[%s1 + $0x8] sm:$0xff]
  %v37 = vld [vmem:[%s1 + $0x10] sm:$0xff]
  %v38 = vld [vmem:[%s1 + $0x18] sm:$0xff]
  %v39 = vld [vmem:[%s1 + $0x20] sm:$0xff]
  %v40 = vld [vmem:[%s1 + $0x28] sm:$0xff]
  %v41 = vld [vmem:[%s1 + $0x30] sm:$0xff]
  %v42 = vld [vmem:[%s1 + $0x38] sm:$0xff]
  %v43 = vld [vmem:[%s1 + $0x40] sm:$0xff]
  %v44 = vld [vmem:[%s1 + $0x48] sm:$0xff]
  %v45 = vld [vmem:[%s1 + $0x50] sm:$0xff]
  %v46 = vld [vmem:[%s1 + $0x58] sm:$0xff]
  %v47 = vld [vmem:[%s1 + $0x60] sm:$0xff]
  %v48 = vld [vmem:[%s1 + $0x68] sm:$0xff]
  %v49 = vld [vmem:[%s1 + $0x70] sm:$0xff]
  %v50 = vld [vmem:[%s1 + $0x78] sm:$0xff]
  %v51 = vld [vmem:[%s0] sm:$0xff]
  %v52 = vld [vmem:[%s0 + $0x8] sm:$0xff]
  %v53 = vld [vmem:[%s0 + $0x10] sm:$0xff]
  %v54 = vld [vmem:[%s0 + $0x18] sm:$0xff]
  %v55 = vld [vmem:[%s0 + $0x20] sm:$0xff]
  %v56 = vld [vmem:[%s0 + $0x28] sm:$0xff]
  %v57 = vld [vmem:[%s0 + $0x30] sm:$0xff]
  %v58 = vld [vmem:[%s0 + $0x38] sm:$0xff]
  %v59 = vld [vmem:[%s0 + $0x40] sm:$0xff]
  %v60 = vld [vmem:[%s0 + $0x48] sm:$0xff]
  %v61 = vld [vmem:[%s0 + $0x50] sm:$0xff]
  %v62 = vld [vmem:[%s0 + $0x58] sm:$0xff]
  %v63 = vld [vmem:[%s0 + $0x60] sm:$0xff]
  %v64 = vld [vmem:[%s0 + $0x68] sm:$0xff]
  %v65 = vld [vmem:[%s0 + $0x70] sm:$0xff]
  %v66 = vld [vmem:[%s0 + $0x78] sm:$0xff]
  %67 = vmatprep.subr.mxu0 0.0
  %68 = vmatpush1.msra.mxu0 %v66
  %69 = vmatprep.subr.mxu0 0.0
  %70 = vmatpush1.msra.mxu0 %v65
  %71 = vmatprep.subr.mxu0 0.0
  %72 = vmatpush1.msra.mxu0 %v64
  %73 = vmatprep.subr.mxu0 0.0
  %74 = vmatpush1.msra.mxu0 %v63
  %75 = vmatprep.subr.mxu0 0.0
  %76 = vmatpush1.msra.mxu0 %v62
  %77 = vmatprep.subr.mxu0 0.0
  %78 = vmatpush1.msra.mxu0 %v61
  %79 = vmatprep.subr.mxu0 0.0
  %80 = vmatpush1.msra.mxu0 %v60
  %81 = vmatprep.subr.mxu0 0.0
  %82 = vmatpush1.msra.mxu0 %v59
  %83 = vmatprep.subr.mxu0 0.0
  %84 = vmatpush1.msra.mxu0 %v58
  %85 = vmatprep.subr.mxu0 0.0
  %86 = vmatpush1.msra.mxu0 %v57
  %87 = vmatprep.subr.mxu0 0.0
  %88 = vmatpush1.msra.mxu0 %v56
  %89 = vmatprep.subr.mxu0 0.0
  %90 = vmatpush1.msra.mxu0 %v55
  %91 = vmatprep.subr.mxu0 0.0
  %92 = vmatpush1.msra.mxu0 %v54
  %93 = vmatprep.subr.mxu0 0.0
  %94 = vmatpush1.msra.mxu0 %v53
  %95 = vmatprep.subr.mxu0 0.0
  %96 = vmatpush1.msra.mxu0 %v52
  %97 = vmatprep.subr.mxu0 0.0
  %98 = vmatpush1.msra.mxu0 %v51
  %99 = vmatprep.subr.mxu0 0.0
  %100 = vmatpush2.msra.mxu0 0.0
  %101 = vmatprep.subr.mxu0 0.0
  %102 = vmatpush2.msra.mxu0 0.0
  %103 = vmatprep.subr.mxu0 0.0
  %104 = vmatpush2.msra.mxu0 0.0
  %105 = vmatprep.subr.mxu0 0.0
  %106 = vmatpush2.msra.mxu0 0.0
  %107 = vmatprep.subr.mxu0 0.0
  %108 = vmatpush2.msra.mxu0 0.0
  %109 = vmatprep.subr.mxu0 0.0
  %110 = vmatpush2.msra.mxu0 0.0
  %111 = vmatprep.subr.mxu0 0.0
  %112 = vmatpush2.msra.mxu0 0.0
  %113 = vmatprep.subr.mxu0 0.0
  %114 = vmatpush2.msra.mxu0 0.0
  %115 = vmatprep.subr.mxu0 0.0
  %116 = vmatpush2.msra.mxu0 0.0
  %117 = vmatprep.subr.mxu0 0.0
  %118 = vmatpush2.msra.mxu0 0.0
  %119 = vmatprep.subr.mxu0 0.0
  %120 = vmatpush2.msra.mxu0 0.0
  %121 = vmatprep.subr.mxu0 0.0
  %122 = vmatpush2.msra.mxu0 0.0
  %123 = vmatprep.subr.mxu0 0.0
  %124 = vmatpush2.msra.mxu0 0.0
  %125 = vmatprep.subr.mxu0 0.0
  %126 = vmatpush2.msra.mxu0 0.0
  %127 = vmatprep.subr.mxu0 0.0
  %128 = vmatpush2.msra.mxu0 0.0
  %129 = vmatprep.subr.mxu0 0.0
  %130 = vmatpush2.msra.mxu0 0.0
  %131 = vmatprep.mubr.f32.mxu0 0.0
  %132 = vmatmul.mubr.f32.gmra.mxu0 %v35
  %v133 = vpop.f32.mrf.mxu0
  %v134 = vadd.f32 0.0, %v133
  %v135 = vpop.f32.mrf.mxu0
  %136 = vmatprep.mubr.f32.mxu0 0.0
  %137 = vmatmul.mubr.f32.gmra.mxu0 %v36
  %v138 = vpop.f32.mrf.mxu0
  %v139 = vadd.f32 0.0, %v138
  %v140 = vpop.f32.mrf.mxu0
  %141 = vmatprep.mubr.f32.mxu0 0.0
  %142 = vmatmul.mubr.f32.gmra.mxu0 %v37
  %v143 = vpop.f32.mrf.mxu0
  %v144 = vadd.f32 0.0, %v143
  %v145 = vpop.f32.mrf.mxu0
  %146 = vmatprep.mubr.f32.mxu0 0.0
  %147 = vmatmul.mubr.f32.gmra.mxu0 %v38
  %v148 = vpop.f32.mrf.mxu0
  %v149 = vadd.f32 0.0, %v148
  %v150 = vpop.f32.mrf.mxu0
  %151 = vmatprep.mubr.f32.mxu0 0.0
  %152 = vmatmul.mubr.f32.gmra.mxu0 %v39
  %v153 = vpop.f32.mrf.mxu0
  %v154 = vadd.f32 0.0, %v153
  %v155 = vpop.f32.mrf.mxu0
  %156 = vmatprep.mubr.f32.mxu0 0.0
  %157 = vmatmul.mubr.f32.gmra.mxu0 %v40
  %v158 = vpop.f32.mrf.mxu0
  %v159 = vadd.f32 0.0, %v158
  %v160 = vpop.f32.mrf.mxu0
  %161 = vmatprep.mubr.f32.mxu0 0.0
  %162 = vmatmul.mubr.f32.gmra.mxu0 %v41
  %v163 = vpop.f32.mrf.mxu0
  %v164 = vadd.f32 0.0, %v163
  %v165 = vpop.f32.mrf.mxu0
  %166 = vmatprep.mubr.f32.mxu0 0.0
  %167 = vmatmul.mubr.f32.gmra.mxu0 %v42
  %v168 = vpop.f32.mrf.mxu0
  %v169 = vadd.f32 0.0, %v168
  %v170 = vpop.f32.mrf.mxu0
  %171 = vmatprep.mubr.f32.mxu0 0.0
  %172 = vmatmul.mubr.f32.gmra.mxu0 %v43
  %v173 = vpop.f32.mrf.mxu0
  %v174 = vadd.f32 0.0, %v173
  %v175 = vpop.f32.mrf.mxu0
  %176 = vmatprep.mubr.f32.mxu0 0.0
  %177 = vmatmul.mubr.f32.gmra.mxu0 %v44
  %v178 = vpop.f32.mrf.mxu0
  %v179 = vadd.f32 0.0, %v178
  %v180 = vpop.f32.mrf.mxu0
  %181 = vmatprep.mubr.f32.mxu0 0.0
  %182 = vmatmul.mubr.f32.gmra.mxu0 %v45
  %v183 = vpop.f32.mrf.mxu0
  %v184 = vadd.f32 0.0, %v183
  %v185 = vpop.f32.mrf.mxu0
  %186 = vmatprep.mubr.f32.mxu0 0.0
  %187 = vmatmul.mubr.f32.gmra.mxu0 %v46
  %v188 = vpop.f32.mrf.mxu0
  %v189 = vadd.f32 0.0, %v188
  %v190 = vpop.f32.mrf.mxu0
  %191 = vmatprep.mubr.f32.mxu0 0.0
  %192 = vmatmul.mubr.f32.gmra.mxu0 %v47
  %v193 = vpop.f32.mrf.mxu0
  %v194 = vadd.f32 0.0, %v193
  %v195 = vpop.f32.mrf.mxu0
  %196 = vmatprep.mubr.f32.mxu0 0.0
  %197 = vmatmul.mubr.f32.gmra.mxu0 %v48
  %v198 = vpop.f32.mrf.mxu0
  %v199 = vadd.f32 0.0, %v198
  %v200 = vpop.f32.mrf.mxu0
  %201 = vmatprep.mubr.f32.mxu0 0.0
  %202 = vmatmul.mubr.f32.gmra.mxu0 %v49
  %v203 = vpop.f32.mrf.mxu0
  %v204 = vadd.f32 0.0, %v203
  %v205 = vpop.f32.mrf.mxu0
  %206 = vmatprep.mubr.f32.mxu0 0.0
  %207 = vmatmul.mubr.f32.gmra.mxu0 %v50
  %v208 = vpop.f32.mrf.mxu0
  %v209 = vadd.f32 0.0, %v208
  %v210 = vpop.f32.mrf.mxu0
  %211 = vdwg.mxu0
  %v212 = vld [vmem:[%s2] sm:$0xff]
  %v213 = vld [vmem:[%s2 + $0x8] sm:$0xff]
  %v214 = vld [vmem:[%s2 + $0x10] sm:$0xff]
  %v215 = vld [vmem:[%s2 + $0x18] sm:$0xff]
  %v216 = vld [vmem:[%s2 + $0x20] sm:$0xff]
  %v217 = vld [vmem:[%s2 + $0x28] sm:$0xff]
  %v218 = vld [vmem:[%s2 + $0x30] sm:$0xff]
  %v219 = vld [vmem:[%s2 + $0x38] sm:$0xff]
  %v220 = vld [vmem:[%s2 + $0x40] sm:$0xff]
  %v221 = vld [vmem:[%s2 + $0x48] sm:$0xff]
  %v222 = vld [vmem:[%s2 + $0x50] sm:$0xff]
  %v223 = vld [vmem:[%s2 + $0x58] sm:$0xff]
  %v224 = vld [vmem:[%s2 + $0x60] sm:$0xff]
  %v225 = vld [vmem:[%s2 + $0x68] sm:$0xff]
  %v226 = vld [vmem:[%s2 + $0x70] sm:$0xff]
  %v227 = vld [vmem:[%s2 + $0x78] sm:$0xff]
  %v228 = vld [vmem:[%s3] sm:$0x1]
  %v230 = vlaneseq
  %v231 = vshrl.u32 %v230, 7
  %v232 = vsub.s32 0, %v231
  %v233 = vrot.slane %v228, %v232
  %235 = vmatprep.subr.mxu0 0.0
  %236 = vmatpush1.msra.mxu0 %v227
  %237 = vmatprep.subr.mxu0 0.0
  %238 = vmatpush1.msra.mxu0 %v226
  %239 = vmatprep.subr.mxu0 0.0
  %240 = vmatpush1.msra.mxu0 %v225
  %241 = vmatprep.subr.mxu0 0.0
  %242 = vmatpush1.msra.mxu0 %v224
  %243 = vmatprep.subr.mxu0 0.0
  %244 = vmatpush1.msra.mxu0 %v223
  %245 = vmatprep.subr.mxu0 0.0
  %246 = vmatpush1.msra.mxu0 %v222
  %247 = vmatprep.subr.mxu0 0.0
  %248 = vmatpush1.msra.mxu0 %v221
  %249 = vmatprep.subr.mxu0 0.0
  %250 = vmatpush1.msra.mxu0 %v220
  %251 = vmatprep.subr.mxu0 0.0
  %252 = vmatpush1.msra.mxu0 %v219
  %253 = vmatprep.subr.mxu0 0.0
  %254 = vmatpush1.msra.mxu0 %v218
  %255 = vmatprep.subr.mxu0 0.0
  %256 = vmatpush1.msra.mxu0 %v217
  %257 = vmatprep.subr.mxu0 0.0
  %258 = vmatpush1.msra.mxu0 %v216
  %259 = vmatprep.subr.mxu0 0.0
  %260 = vmatpush1.msra.mxu0 %v215
  %261 = vmatprep.subr.mxu0 0.0
  %262 = vmatpush1.msra.mxu0 %v214
  %263 = vmatprep.subr.mxu0 0.0
  %264 = vmatpush1.msra.mxu0 %v213
  %265 = vmatprep.subr.mxu0 0.0
  %266 = vmatpush1.msra.mxu0 %v212
  %267 = vmatprep.subr.mxu0 0.0
  %268 = vmatpush2.msra.mxu0 0.0
  %269 = vmatprep.subr.mxu0 0.0
  %270 = vmatpush2.msra.mxu0 0.0
  %271 = vmatprep.subr.mxu0 0.0
  %272 = vmatpush2.msra.mxu0 0.0
  %273 = vmatprep.subr.mxu0 0.0
  %274 = vmatpush2.msra.mxu0 0.0
  %275 = vmatprep.subr.mxu0 0.0
  %276 = vmatpush2.msra.mxu0 0.0
  %277 = vmatprep.subr.mxu0 0.0
  %278 = vmatpush2.msra.mxu0 0.0
  %279 = vmatprep.subr.mxu0 0.0
  %280 = vmatpush2.msra.mxu0 0.0
  %281 = vmatprep.subr.mxu0 0.0
  %282 = vmatpush2.msra.mxu0 0.0
  %283 = vmatprep.subr.mxu0 0.0
  %284 = vmatpush2.msra.mxu0 0.0
  %285 = vmatprep.subr.mxu0 0.0
  %286 = vmatpush2.msra.mxu0 0.0
  %287 = vmatprep.subr.mxu0 0.0
  %288 = vmatpush2.msra.mxu0 0.0
  %289 = vmatprep.subr.mxu0 0.0
  %290 = vmatpush2.msra.mxu0 0.0
  %291 = vmatprep.subr.mxu0 0.0
  %292 = vmatpush2.msra.mxu0 0.0
  %293 = vmatprep.subr.mxu0 0.0
  %294 = vmatpush2.msra.mxu0 0.0
  %295 = vmatprep.subr.mxu0 0.0
  %296 = vmatpush2.msra.mxu0 0.0
  %297 = vmatprep.subr.mxu0 0.0
  %298 = vmatpush2.msra.mxu0 0.0
  %299 = vmatprep.mubr.f32.mxu0 0.0
  %300 = vmatmul.mubr.f32.gmra.mxu0 %v134
  %v301 = vpop.f32.mrf.mxu0
  %v302 = vadd.f32 %v233, %v301
  %v303 = vpop.f32.mrf.mxu0
  %304 = vmatprep.mubr.f32.mxu0 0.0
  %305 = vmatmul.mubr.f32.gmra.mxu0 %v139
  %v306 = vpop.f32.mrf.mxu0
  %v307 = vadd.f32 %v233, %v306
  %v308 = vpop.f32.mrf.mxu0
  %309 = vmatprep.mubr.f32.mxu0 0.0
  %310 = vmatmul.mubr.f32.gmra.mxu0 %v144
  %v311 = vpop.f32.mrf.mxu0
  %v312 = vadd.f32 %v233, %v311
  %v313 = vpop.f32.mrf.mxu0
  %314 = vmatprep.mubr.f32.mxu0 0.0
  %315 = vmatmul.mubr.f32.gmra.mxu0 %v149
  %v316 = vpop.f32.mrf.mxu0
  %v317 = vadd.f32 %v233, %v316
  %v318 = vpop.f32.mrf.mxu0
  %319 = vmatprep.mubr.f32.mxu0 0.0
  %320 = vmatmul.mubr.f32.gmra.mxu0 %v154
  %v321 = vpop.f32.mrf.mxu0
  %v322 = vadd.f32 %v233, %v321
  %v323 = vpop.f32.mrf.mxu0
  %324 = vmatprep.mubr.f32.mxu0 0.0
  %325 = vmatmul.mubr.f32.gmra.mxu0 %v159
  %v326 = vpop.f32.mrf.mxu0
  %v327 = vadd.f32 %v233, %v326
  %v328 = vpop.f32.mrf.mxu0
  %329 = vmatprep.mubr.f32.mxu0 0.0
  %330 = vmatmul.mubr.f32.gmra.mxu0 %v164
  %v331 = vpop.f32.mrf.mxu0
  %v332 = vadd.f32 %v233, %v331
  %v333 = vpop.f32.mrf.mxu0
  %334 = vmatprep.mubr.f32.mxu0 0.0
  %335 = vmatmul.mubr.f32.gmra.mxu0 %v169
  %v336 = vpop.f32.mrf.mxu0
  %v337 = vadd.f32 %v233, %v336
  %v338 = vpop.f32.mrf.mxu0
  %339 = vmatprep.mubr.f32.mxu0 0.0
  %340 = vmatmul.mubr.f32.gmra.mxu0 %v174
  %v341 = vpop.f32.mrf.mxu0
  %v342 = vadd.f32 %v233, %v341
  %v343 = vpop.f32.mrf.mxu0
  %344 = vmatprep.mubr.f32.mxu0 0.0
  %345 = vmatmul.mubr.f32.gmra.mxu0 %v179
  %v346 = vpop.f32.mrf.mxu0
  %v347 = vadd.f32 %v233, %v346
  %v348 = vpop.f32.mrf.mxu0
  %349 = vmatprep.mubr.f32.mxu0 0.0
  %350 = vmatmul.mubr.f32.gmra.mxu0 %v184
  %v351 = vpop.f32.mrf.mxu0
  %v352 = vadd.f32 %v233, %v351
  %v353 = vpop.f32.mrf.mxu0
  %354 = vmatprep.mubr.f32.mxu0 0.0
  %355 = vmatmul.mubr.f32.gmra.mxu0 %v189
  %v356 = vpop.f32.mrf.mxu0
  %v357 = vadd.f32 %v233, %v356
  %v358 = vpop.f32.mrf.mxu0
  %359 = vmatprep.mubr.f32.mxu0 0.0
  %360 = vmatmul.mubr.f32.gmra.mxu0 %v194
  %v361 = vpop.f32.mrf.mxu0
  %v362 = vadd.f32 %v233, %v361
  %v363 = vpop.f32.mrf.mxu0
  %364 = vmatprep.mubr.f32.mxu0 0.0
  %365 = vmatmul.mubr.f32.gmra.mxu0 %v199
  %v366 = vpop.f32.mrf.mxu0
  %v367 = vadd.f32 %v233, %v366
  %v368 = vpop.f32.mrf.mxu0
  %369 = vmatprep.mubr.f32.mxu0 0.0
  %370 = vmatmul.mubr.f32.gmra.mxu0 %v204
  %v371 = vpop.f32.mrf.mxu0
  %v372 = vadd.f32 %v233, %v371
  %v373 = vpop.f32.mrf.mxu0
  %374 = vmatprep.mubr.f32.mxu0 0.0
  %375 = vmatmul.mubr.f32.gmra.mxu0 %v209
  %v376 = vpop.f32.mrf.mxu0
  %v377 = vadd.f32 %v233, %v376
  %v378 = vpop.f32.mrf.mxu0
  %379 = vdwg.mxu0
  %v380 = vld [vmem:[%s4] sm:$0xff]
  %v381 = vld [vmem:[%s4 + $0x8] sm:$0xff]
  %v382 = vld [vmem:[%s4 + $0x10] sm:$0xff]
  %v383 = vld [vmem:[%s4 + $0x18] sm:$0xff]
  %v384 = vld [vmem:[%s4 + $0x20] sm:$0xff]
  %v385 = vld [vmem:[%s4 + $0x28] sm:$0xff]
  %v386 = vld [vmem:[%s4 + $0x30] sm:$0xff]
  %v387 = vld [vmem:[%s4 + $0x38] sm:$0xff]
  %v388 = vld [vmem:[%s4 + $0x40] sm:$0xff]
  %v389 = vld [vmem:[%s4 + $0x48] sm:$0xff]
  %v390 = vld [vmem:[%s4 + $0x50] sm:$0xff]
  %v391 = vld [vmem:[%s4 + $0x58] sm:$0xff]
  %v392 = vld [vmem:[%s4 + $0x60] sm:$0xff]
  %v393 = vld [vmem:[%s4 + $0x68] sm:$0xff]
  %v394 = vld [vmem:[%s4 + $0x70] sm:$0xff]
  %v395 = vld [vmem:[%s4 + $0x78] sm:$0xff]
  %v396 = vmul.f32 %v302, %v380
  %v397 = vmul.f32 %v307, %v381
  %v398 = vmul.f32 %v312, %v382
  %v399 = vmul.f32 %v317, %v383
  %v400 = vmul.f32 %v322, %v384
  %v401 = vmul.f32 %v327, %v385
  %v402 = vmul.f32 %v332, %v386
  %v403 = vmul.f32 %v337, %v387
  %v404 = vmul.f32 %v342, %v388
  %v405 = vmul.f32 %v347, %v389
  %v406 = vmul.f32 %v352, %v390
  %v407 = vmul.f32 %v357, %v391
  %v408 = vmul.f32 %v362, %v392
  %v409 = vmul.f32 %v367, %v393
  %v410 = vmul.f32 %v372, %v394
  %v411 = vmul.f32 %v377, %v395
  %v412 = vmax.f32 %v396, 0.0
  %v413 = vmax.f32 %v397, 0.0
  %v414 = vmax.f32 %v398, 0.0
  %v415 = vmax.f32 %v399, 0.0
  %v416 = vmax.f32 %v400, 0.0
  %v417 = vmax.f32 %v401, 0.0
  %v418 = vmax.f32 %v402, 0.0
  %v419 = vmax.f32 %v403, 0.0
  %v420 = vmax.f32 %v404, 0.0
  %v421 = vmax.f32 %v405, 0.0
  %v422 = vmax.f32 %v406, 0.0
  %v423 = vmax.f32 %v407, 0.0
  %v424 = vmax.f32 %v408, 0.0
  %v425 = vmax.f32 %v409, 0.0
  %v426 = vmax.f32 %v410, 0.0
  %v427 = vmax.f32 %v411, 0.0
  %v428 = vld [vmem:[%s5] sm:$0xff]
  %429 = vmatprep.subr.mxu0 0.0
  %430 = vmatpush1.msra.mxu0 %v427
  %431 = vmatprep.subr.mxu0 0.0
  %432 = vmatpush1.msra.mxu0 %v426
  %433 = vmatprep.subr.mxu0 0.0
  %434 = vmatpush1.msra.mxu0 %v425
  %435 = vmatprep.subr.mxu0 0.0
  %436 = vmatpush1.msra.mxu0 %v424
  %437 = vmatprep.subr.mxu0 0.0
  %438 = vmatpush1.msra.mxu0 %v423
  %439 = vmatprep.subr.mxu0 0.0
  %440 = vmatpush1.msra.mxu0 %v422
  %441 = vmatprep.subr.mxu0 0.0
  %442 = vmatpush1.msra.mxu0 %v421
  %443 = vmatprep.subr.mxu0 0.0
  %444 = vmatpush1.msra.mxu0 %v420
  %445 = vmatprep.subr.mxu0 0.0
  %446 = vmatpush1.msra.mxu0 %v419
  %447 = vmatprep.subr.mxu0 0.0
  %448 = vmatpush1.msra.mxu0 %v418
  %449 = vmatprep.subr.mxu0 0.0
  %450 = vmatpush1.msra.mxu0 %v417
  %451 = vmatprep.subr.mxu0 0.0
  %452 = vmatpush1.msra.mxu0 %v416
  %453 = vmatprep.subr.mxu0 0.0
  %454 = vmatpush1.msra.mxu0 %v415
  %455 = vmatprep.subr.mxu0 0.0
  %456 = vmatpush1.msra.mxu0 %v414
  %457 = vmatprep.subr.mxu0 0.0
  %458 = vmatpush1.msra.mxu0 %v413
  %459 = vmatprep.subr.mxu0 0.0
  %460 = vmatpush1.msra.mxu0 %v412
  %461 = vmatprep.subr.mxu0 0.0
  %462 = vmatpush2.msra.mxu0 0.0
  %463 = vmatprep.subr.mxu0 0.0
  %464 = vmatpush2.msra.mxu0 0.0
  %465 = vmatprep.subr.mxu0 0.0
  %466 = vmatpush2.msra.mxu0 0.0
  %467 = vmatprep.subr.mxu0 0.0
  %468 = vmatpush2.msra.mxu0 0.0
  %469 = vmatprep.subr.mxu0 0.0
  %470 = vmatpush2.msra.mxu0 0.0
  %471 = vmatprep.subr.mxu0 0.0
  %472 = vmatpush2.msra.mxu0 0.0
  %473 = vmatprep.subr.mxu0 0.0
  %474 = vmatpush2.msra.mxu0 0.0
  %475 = vmatprep.subr.mxu0 0.0
  %476 = vmatpush2.msra.mxu0 0.0
  %477 = vmatprep.subr.mxu0 0.0
  %478 = vmatpush2.msra.mxu0 0.0
  %479 = vmatprep.subr.mxu0 0.0
  %480 = vmatpush2.msra.mxu0 0.0
  %481 = vmatprep.subr.mxu0 0.0
  %482 = vmatpush2.msra.mxu0 0.0
  %483 = vmatprep.subr.mxu0 0.0
  %484 = vmatpush2.msra.mxu0 0.0
  %485 = vmatprep.subr.mxu0 0.0
  %486 = vmatpush2.msra.mxu0 0.0
  %487 = vmatprep.subr.mxu0 0.0
  %488 = vmatpush2.msra.mxu0 0.0
  %489 = vmatprep.subr.mxu0 0.0
  %490 = vmatpush2.msra.mxu0 0.0
  %491 = vmatprep.subr.mxu0 0.0
  %492 = vmatpush2.msra.mxu0 0.0
  %493 = vmatprep.mubr.f32.mxu0 0.0
  %494 = vmatmul.mubr.f32.gmra.mxu0 %v428
  %v495 = vpop.f32.mrf.mxu0
  %v496 = vadd.f32 0.0, %v495
  %v497 = vpop.f32.mrf.mxu0
  %498 = vdwg.mxu0
  %v499 = vld [vmem:[%s6] sm:$0xff]
  %v500 = vld [vmem:[%s6 + $0x8] sm:$0xff]
  %v501 = vld [vmem:[%s6 + $0x10] sm:$0xff]
  %v502 = vld [vmem:[%s6 + $0x18] sm:$0xff]
  %v503 = vld [vmem:[%s6 + $0x20] sm:$0xff]
  %v504 = vld [vmem:[%s6 + $0x28] sm:$0xff]
  %v505 = vld [vmem:[%s6 + $0x30] sm:$0xff]
  %v506 = vld [vmem:[%s6 + $0x38] sm:$0xff]
  %v507 = vld [vmem:[%s6 + $0x40] sm:$0xff]
  %v508 = vld [vmem:[%s6 + $0x48] sm:$0xff]
  %v509 = vld [vmem:[%s6 + $0x50] sm:$0xff]
  %v510 = vld [vmem:[%s6 + $0x58] sm:$0xff]
  %v511 = vld [vmem:[%s6 + $0x60] sm:$0xff]
  %v512 = vld [vmem:[%s6 + $0x68] sm:$0xff]
  %v513 = vld [vmem:[%s6 + $0x70] sm:$0xff]
  %v514 = vld [vmem:[%s6 + $0x78] sm:$0xff]
  %v515 = vld [vmem:[%s7] sm:$0x1]
  %v517 = vlaneseq
  %v518 = vshrl.u32 %v517, 7
  %v519 = vsub.s32 0, %v518
  %v520 = vrot.slane %v515, %v519
  %522 = vmatprep.subr.mxu0 0.0
  %523 = vmatpush1.msra.mxu0 %v514
  %524 = vmatprep.subr.mxu0 0.0
  %525 = vmatpush1.msra.mxu0 %v513
  %526 = vmatprep.subr.mxu0 0.0
  %527 = vmatpush1.msra.mxu0 %v512
  %528 = vmatprep.subr.mxu0 0.0
  %529 = vmatpush1.msra.mxu0 %v511
  %530 = vmatprep.subr.mxu0 0.0
  %531 = vmatpush1.msra.mxu0 %v510
  %532 = vmatprep.subr.mxu0 0.0
  %533 = vmatpush1.msra.mxu0 %v509
  %534 = vmatprep.subr.mxu0 0.0
  %535 = vmatpush1.msra.mxu0 %v508
  %536 = vmatprep.subr.mxu0 0.0
  %537 = vmatpush1.msra.mxu0 %v507
  %538 = vmatprep.subr.mxu0 0.0
  %539 = vmatpush1.msra.mxu0 %v506
  %540 = vmatprep.subr.mxu0 0.0
  %541 = vmatpush1.msra.mxu0 %v505
  %542 = vmatprep.subr.mxu0 0.0
  %543 = vmatpush1.msra.mxu0 %v504
  %544 = vmatprep.subr.mxu0 0.0
  %545 = vmatpush1.msra.mxu0 %v503
  %546 = vmatprep.subr.mxu0 0.0
  %547 = vmatpush1.msra.mxu0 %v502
  %548 = vmatprep.subr.mxu0 0.0
  %549 = vmatpush1.msra.mxu0 %v501
  %550 = vmatprep.subr.mxu0 0.0
  %551 = vmatpush1.msra.mxu0 %v500
  %552 = vmatprep.subr.mxu0 0.0
  %553 = vmatpush1.msra.mxu0 %v499
  %554 = vmatprep.subr.mxu0 0.0
  %555 = vmatpush2.msra.mxu0 0.0
  %556 = vmatprep.subr.mxu0 0.0
  %557 = vmatpush2.msra.mxu0 0.0
  %558 = vmatprep.subr.mxu0 0.0
  %559 = vmatpush2.msra.mxu0 0.0
  %560 = vmatprep.subr.mxu0 0.0
  %561 = vmatpush2.msra.mxu0 0.0
  %562 = vmatprep.subr.mxu0 0.0
  %563 = vmatpush2.msra.mxu0 0.0
  %564 = vmatprep.subr.mxu0 0.0
  %565 = vmatpush2.msra.mxu0 0.0
  %566 = vmatprep.subr.mxu0 0.0
  %567 = vmatpush2.msra.mxu0 0.0
  %568 = vmatprep.subr.mxu0 0.0
  %569 = vmatpush2.msra.mxu0 0.0
  %570 = vmatprep.subr.mxu0 0.0
  %571 = vmatpush2.msra.mxu0 0.0
  %572 = vmatprep.subr.mxu0 0.0
  %573 = vmatpush2.msra.mxu0 0.0
  %574 = vmatprep.subr.mxu0 0.0
  %575 = vmatpush2.msra.mxu0 0.0
  %576 = vmatprep.subr.mxu0 0.0
  %577 = vmatpush2.msra.mxu0 0.0
  %578 = vmatprep.subr.mxu0 0.0
  %579 = vmatpush2.msra.mxu0 0.0
  %580 = vmatprep.subr.mxu0 0.0
  %581 = vmatpush2.msra.mxu0 0.0
  %582 = vmatprep.subr.mxu0 0.0
  %583 = vmatpush2.msra.mxu0 0.0
  %584 = vmatprep.subr.mxu0 0.0
  %585 = vmatpush2.msra.mxu0 0.0
  %586 = vmatprep.mubr.f32.mxu0 0.0
  %587 = vmatmul.mubr.f32.gmra.mxu0 %v496
  %v588 = vpop.f32.mrf.mxu0
  %v589 = vadd.f32 %v520, %v588
  %v590 = vpop.f32.mrf.mxu0
  %591 = vdwg.mxu0
  %v592 = vld [vmem:[%s8] sm:$0xff]
  %v593 = vld [vmem:[%s8 + $0x8] sm:$0xff]
  %v594 = vld [vmem:[%s8 + $0x10] sm:$0xff]
  %v595 = vld [vmem:[%s8 + $0x18] sm:$0xff]
  %v596 = vld [vmem:[%s8 + $0x20] sm:$0xff]
  %v597 = vld [vmem:[%s8 + $0x28] sm:$0xff]
  %v598 = vld [vmem:[%s8 + $0x30] sm:$0xff]
  %v599 = vld [vmem:[%s8 + $0x38] sm:$0xff]
  %v600 = vld [vmem:[%s8 + $0x40] sm:$0xff]
  %v601 = vld [vmem:[%s8 + $0x48] sm:$0xff]
  %v602 = vld [vmem:[%s8 + $0x50] sm:$0xff]
  %v603 = vld [vmem:[%s8 + $0x58] sm:$0xff]
  %v604 = vld [vmem:[%s8 + $0x60] sm:$0xff]
  %v605 = vld [vmem:[%s8 + $0x68] sm:$0xff]
  %v606 = vld [vmem:[%s8 + $0x70] sm:$0xff]
  %v607 = vld [vmem:[%s8 + $0x78] sm:$0xff]
  %v608 = vld [vmem:[%s9] sm:$0x1]
  %v610 = vlaneseq
  %v611 = vshrl.u32 %v610, 7
  %v612 = vsub.s32 0, %v611
  %v613 = vrot.slane %v608, %v612
  %615 = vmatprep.subr.mxu0 0.0
  %616 = vmatpush1.msra.mxu0 %v607
  %617 = vmatprep.subr.mxu0 0.0
  %618 = vmatpush1.msra.mxu0 %v606
  %619 = vmatprep.subr.mxu0 0.0
  %620 = vmatpush1.msra.mxu0 %v605
  %621 = vmatprep.subr.mxu0 0.0
  %622 = vmatpush1.msra.mxu0 %v604
  %623 = vmatprep.subr.mxu0 0.0
  %624 = vmatpush1.msra.mxu0 %v603
  %625 = vmatprep.subr.mxu0 0.0
  %626 = vmatpush1.msra.mxu0 %v602
  %627 = vmatprep.subr.mxu0 0.0
  %628 = vmatpush1.msra.mxu0 %v601
  %629 = vmatprep.subr.mxu0 0.0
  %630 = vmatpush1.msra.mxu0 %v600
  %631 = vmatprep.subr.mxu0 0.0
  %632 = vmatpush1.msra.mxu0 %v599
  %633 = vmatprep.subr.mxu0 0.0
  %634 = vmatpush1.msra.mxu0 %v598
  %635 = vmatprep.subr.mxu0 0.0
  %636 = vmatpush1.msra.mxu0 %v597
  %637 = vmatprep.subr.mxu0 0.0
  %638 = vmatpush1.msra.mxu0 %v596
  %639 = vmatprep.subr.mxu0 0.0
  %640 = vmatpush1.msra.mxu0 %v595
  %641 = vmatprep.subr.mxu0 0.0
  %642 = vmatpush1.msra.mxu0 %v594
  %643 = vmatprep.subr.mxu0 0.0
  %644 = vmatpush1.msra.mxu0 %v593
  %645 = vmatprep.subr.mxu0 0.0
  %646 = vmatpush1.msra.mxu0 %v592
  %647 = vmatprep.subr.mxu0 0.0
  %648 = vmatpush2.msra.mxu0 0.0
  %649 = vmatprep.subr.mxu0 0.0
  %650 = vmatpush2.msra.mxu0 0.0
  %651 = vmatprep.subr.mxu0 0.0
  %652 = vmatpush2.msra.mxu0 0.0
  %653 = vmatprep.subr.mxu0 0.0
  %654 = vmatpush2.msra.mxu0 0.0
  %655 = vmatprep.subr.mxu0 0.0
  %656 = vmatpush2.msra.mxu0 0.0
  %657 = vmatprep.subr.mxu0 0.0
  %658 = vmatpush2.msra.mxu0 0.0
  %659 = vmatprep.subr.mxu0 0.0
  %660 = vmatpush2.msra.mxu0 0.0
  %661 = vmatprep.subr.mxu0 0.0
  %662 = vmatpush2.msra.mxu0 0.0
  %663 = vmatprep.subr.mxu0 0.0
  %664 = vmatpush2.msra.mxu0 0.0
  %665 = vmatprep.subr.mxu0 0.0
  %666 = vmatpush2.msra.mxu0 0.0
  %667 = vmatprep.subr.mxu0 0.0
  %668 = vmatpush2.msra.mxu0 0.0
  %669 = vmatprep.subr.mxu0 0.0
  %670 = vmatpush2.msra.mxu0 0.0
  %671 = vmatprep.subr.mxu0 0.0
  %672 = vmatpush2.msra.mxu0 0.0
  %673 = vmatprep.subr.mxu0 0.0
  %674 = vmatpush2.msra.mxu0 0.0
  %675 = vmatprep.subr.mxu0 0.0
  %676 = vmatpush2.msra.mxu0 0.0
  %677 = vmatprep.subr.mxu0 0.0
  %678 = vmatpush2.msra.mxu0 0.0
  %679 = vmatprep.mubr.f32.mxu0 0.0
  %680 = vmatmul.mubr.f32.gmra.mxu0 %v589
  %v681 = vpop.f32.mrf.mxu0
  %v682 = vadd.f32 %v613, %v681
  %v683 = vpop.f32.mrf.mxu0
  %684 = vdwg.mxu0
  %685 = vst [vmem:[%s10] sm:$0xff] %v682
  // Predicated region
  $region42: #{gcn_forward.1} parent=0 // pred_check
    _
  $region43: #{gcn_forward.1} parent=0 // pred_check_branch
    %687 = sbr.rel (0) target = $region45
  $region44: #{gcn_forward.1} parent=0 // pred_region
    _
  $region45: #{gcn_forward.1} parent=0 // pred_fallthru
    _
  // Predicated region
  $region46: #{gcn_forward.1} parent=0 // pred_check
    _
  $region47: #{gcn_forward.1} parent=0 // pred_check_branch
    %689 = sbr.rel (0) target = $region49
  $region48: #{gcn_forward.1} parent=0 // pred_region
    _
  $region49: #{gcn_forward.1} parent=0 // pred_fallthru
    _

</llo_original>
